<compile_context>
chip_gen: v7x
topology: tpu7x:2x2x1
jax: 0.10.0
libtpu: 0.0.40
codegen_flags: <defaults>
</compile_context>

<pallas_src>
import functools

import jax
import jax.numpy as jnp
from jax import lax
from jax.experimental import pallas as pl
from jax.experimental.pallas import tpu as pltpu


def _round_up(x, m):
    return ((x + m - 1) // m) * m


def _causal_conv1d_kernel(*refs, kernel_size, dilation, pad, has_halo, nb, split_k):
    if has_halo:
        x_ref, xh_ref, w_ref, b_ref, o_ref = refs
    else:
        x_ref, w_ref, b_ref, o_ref = refs
    tl = o_ref.shape[2]
    c_in = x_ref.shape[1]
    c_out = o_ref.shape[1]
    halo_w = xh_ref.shape[2] if has_halo else 0

    cur = x_ref[...]                                    # (Nb, C_in, TL)
    if has_halo:
        h = xh_ref[...]                                 # (Nb, C_in, H)
        # First L-tile: the halo lies left of the sequence -> causal zero pad,
        # done in-register (replaces the old full-array jnp.pad HBM pass).
        h = jnp.where(pl.program_id(1) == 0, jnp.zeros_like(h), h)
        win = jnp.concatenate([h, cur], axis=-1)        # (Nb, C_in, H+TL), lane-aligned
    else:
        win = cur
    wwin = win.shape[-1]

    def tap(j):
        # Tap j of output column t reads win[..., halo_w - pad + j*dilation + t].
        start = halo_w - pad + j * dilation
        if start == 0:
            return win[:, :, :tl]
        if start % 128 == 0:                            # lane-aligned: cheap slice
            return win[:, :, start:start + tl]
        # Unaligned shift: XLU lane rotate (pltpu.roll matches jnp.roll semantics)
        # keeps the shift off the VPU / load-store slots, then an aligned slice.
        return pltpu.roll(win, wwin - start, axis=win.ndim - 1)[:, :, :tl]

    w = w_ref[...]                                      # (C_out, K*C_in)
    bvec = b_ref[...].astype(jnp.float32)               # (C_out, 1)

    if split_k:
        # Large C_in: K accumulated matmuls -- avoids materializing the (K*C_in, TL)
        # stacked copy through the vector-store slot; on v7x the MRB accumulates in
        # place so chaining the K matmuls adds no result-path cost.
        accs = [jnp.zeros((c_out, tl), jnp.float32) for _ in range(nb)]
        for j in range(kernel_size):
            tj = tap(j)
            wj = w[:, j * c_in:(j + 1) * c_in]
            for b in range(nb):
                accs[b] = accs[b] + jnp.dot(wj, tj[b],
                                            preferred_element_type=jnp.float32)
        for b in range(nb):
            o_ref[b] = (accs[b] + bvec).astype(o_ref.dtype)
    else:
        # Small C_in: fold the K taps into one deep (C_out, K*C_in)@(K*C_in, TL)
        # MXU contraction per batch row.
        taps = [tap(j) for j in range(kernel_size)]
        stacked = taps[0] if kernel_size == 1 else jnp.concatenate(taps, axis=1)
        for b in range(nb):
            acc = jnp.dot(w, stacked[b], preferred_element_type=jnp.float32)
            o_ref[b] = (acc + bvec).astype(o_ref.dtype)


def causal_conv1d(x_ncl, weight, bias, *, stride=1, dilation=1,
                  l_tile=2048, batch_block=None, compute_dtype=None,
                  vmem_limit_bytes=48 * 1024 * 1024):
    """x_ncl: (N, C_in, L); weight: (C_out, C_in, K); bias: (C_out,) -> (N, C_out, L_out).

    compute_dtype: pass jnp.bfloat16 on v5e/v6e/v7x for large channel counts
    (bf16-native MXU + half the input HBM stream; accumulation stays f32).  Prefer
    passing bf16 inputs directly so the cast does not add an HBM pass.
    """
    N, C_in, L = x_ncl.shape
    C_out, C_in_w, K = weight.shape
    assert C_in_w == C_in, (C_in_w, C_in)

    if stride != 1:
        # TODO(synk): stride > 1 (rare for causal/TCN convs) needs strided lane slices
        # that do not lower cleanly in Mosaic; fall back to XLA's conv for it.
        pad = (K - 1) * dilation + (1 - stride)
        xs = jnp.pad(x_ncl, ((0, 0), (0, 0), (pad, 0))) if pad >= 0 else x_ncl[:, :, -pad:]
        y = lax.conv_general_dilated(
            xs, weight, window_strides=(stride,), padding=[(0, 0)],
            rhs_dilation=(dilation,), dimension_numbers=("NCH", "OIH", "NCH"))
        return y + bias[None, :, None]

    pad = (K - 1) * dilation                 # stride == 1
    l_out = L                                # causal conv preserves length at stride 1

    # Fold the K taps into the contraction axis: row j*C_in + ci  <-  weight[:, ci, j].
    w2 = jnp.transpose(weight, (0, 2, 1)).reshape(C_out, K * C_in)
    b2 = bias.astype(jnp.float32).reshape(C_out, 1)
    x_in = x_ncl
    if compute_dtype is not None:
        x_in = x_in.astype(compute_dtype)
        w2 = w2.astype(compute_dtype)
    in_item = x_in.dtype.itemsize
    out_item = x_ncl.dtype.itemsize

    # ---- tiling ---------------------------------------------------------------
    # TL: output columns per grid step (lane axis, multiple of 128).
    # H : left-halo width covering the causal receptive field; a multiple of 128
    #     that divides TL so the halo lands on a block-aligned window of x.
    H = _round_up(pad, 128) if pad > 0 else 0
    TL = _round_up(min(max(l_tile, 128), _round_up(l_out, 128)), 128)
    if H:
        TL = _round_up(TL, H)
    unit = max(H, 128)

    split_k = (C_in >= 128) and (K > 1)

    # Batch blocking: target ~1 MiB streamed per grid step, capped so the in-kernel
    # batch unroll stays small.  Multi-step grids keep both v7x TensorCores busy
    # under ("parallel", "parallel"); on single-TC v5e/v6e raise l_tile instead.
    per_batch = C_in * (TL + H) * in_item + C_out * TL * out_item
    if batch_block is None:
        Nb = int(min(N, 8, max(1, (1 << 20) // max(per_batch, 1))))
    else:
        Nb = int(min(N, max(1, batch_block)))

    # VMEM budget (v7x has only 64 MiB physical): double-buffered streams plus the
    # in-kernel window / stacked-tap copies must fit; shrink Nb, then TL.
    def _vmem(nb, tl):
        stream = 2 * nb * (C_in * (tl + H) * in_item + C_out * tl * out_item)
        wgt = 2 * C_out * (K * C_in * in_item + 4)
        win = nb * C_in * (tl + H) * in_item
        stk = nb * (C_in if split_k else K * C_in) * tl * in_item
        acc = nb * C_out * tl * 4
        return stream + wgt + win + stk + acc

    budget = int(0.75 * vmem_limit_bytes)
    while Nb > 1 and _vmem(Nb, TL) > budget:
        Nb -= 1
    while TL > unit and _vmem(Nb, TL) > budget:
        TL = max(unit, (TL // 2 // unit) * unit)

    n_b = pl.cdiv(N, Nb)
    n_l = pl.cdiv(l_out, TL)
    chunks = TL // H if H else 0

    in_specs = [pl.BlockSpec((Nb, C_in, TL), lambda b, i: (b, 0, i))]
    operands = [x_in]
    if H:
        # Left halo: the H input columns just before this tile (block-aligned because
        # TL % H == 0).  For the first tile the index is clamped and the kernel
        # zeroes it (the causal left pad).  Declared only when actually needed.
        in_specs.append(pl.BlockSpec(
            (Nb, C_in, H), lambda b, i: (b, 0, jnp.maximum(i * chunks - 1, 0))))
        operands.append(x_in)
    in_specs += [pl.BlockSpec((C_out, K * C_in), lambda b, i: (0, 0)),   # resident weights
                 pl.BlockSpec((C_out, 1), lambda b, i: (0, 0))]          # resident bias
    operands += [w2, b2]

    kernel = functools.partial(
        _causal_conv1d_kernel, kernel_size=K, dilation=dilation, pad=pad,
        has_halo=bool(H), nb=Nb, split_k=split_k)

    cost = pl.CostEstimate(
        flops=2 * N * l_out * C_out * K * C_in,
        bytes_accessed=(N * C_in * L * in_item + C_out * K * C_in * in_item
                        + N * C_out * l_out * out_item),
        transcendentals=0)

    # Output is written at its true length: the ragged last tile is a masked store,
    # so no wrapper trim (and no extra HBM pass over the output).
    return pl.pallas_call(
        kernel,
        out_shape=jax.ShapeDtypeStruct((N, C_out, l_out), x_ncl.dtype),
        grid=(n_b, n_l),
        in_specs=in_specs,
        out_specs=pl.BlockSpec((Nb, C_out, TL), lambda b, i: (b, 0, i)),
        compiler_params=pltpu.CompilerParams(
            dimension_semantics=("parallel", "parallel"),
            vmem_limit_bytes=vmem_limit_bytes),
        cost_estimate=cost,
    )(*operands)


def _reference(x, weight, bias, *, stride, dilation):
    K = weight.shape[-1]
    pad = (K - 1) * dilation + (1 - stride)
    xs = jnp.pad(x, ((0, 0), (0, 0), (pad, 0))) if pad >= 0 else x[:, :, -pad:]
    y = lax.conv_general_dilated(
        xs, weight, window_strides=(stride,), padding=[(0, 0)],
        rhs_dilation=(dilation,), dimension_numbers=("NCH", "OIH", "NCH"),
        precision=lax.Precision.HIGHEST)
    return y + bias[None, :, None]


if __name__ == "__main__":
    def _check(N, C_in, C_out, L, K, dilation, l_tile, batch_block, key):
        kx, kw, kb = jax.random.split(key, 3)
        x = jax.random.normal(kx, (N, C_in, L), dtype=jnp.float32)
        # PyTorch-style Conv1d init: U(-1/sqrt(fan_in), 1/sqrt(fan_in)).
        bound = 1.0 / ((C_in * K) ** 0.5)
        weight = jax.random.uniform(kw, (C_out, C_in, K), jnp.float32, -bound, bound)
        bias = jax.random.uniform(kb, (C_out,), jnp.float32, -bound, bound)

        y = causal_conv1d(x, weight, bias, dilation=dilation,
                          l_tile=l_tile, batch_block=batch_block)
        y = jax.block_until_ready(y)
        y_ref = _reference(x, weight, bias, stride=1, dilation=dilation)
        assert y.shape == y_ref.shape, (y.shape, y_ref.shape)
        err = float(jnp.max(jnp.abs(y - y_ref)))
        assert jnp.allclose(y, y_ref, atol=1e-4, rtol=1e-4), err

    key = jax.random.PRNGKey(0)
    k1, k2, k3 = jax.random.split(key, 3)
    # Module-consistent small shape: Conv1d(in=4, out=8, k=3, dilation=2), L=16.
    _check(N=2, C_in=4, C_out=8, L=16, K=3, dilation=2, l_tile=512, batch_block=None, key=k1)
    # Multi-tile L: exercises the in-kernel causal pad, left-halo blocks and the
    # ragged (masked) last output tile.
    _check(N=2, C_in=4, C_out=8, L=300, K=3, dilation=3, l_tile=128, batch_block=None, key=k2)
    # Ragged batch block (Nb=2 over N=3) and a larger kernel.
    _check(N=3, C_in=4, C_out=8, L=160, K=5, dilation=1, l_tile=128, batch_block=2, key=k3)
    print("KERNEL_OK")
</pallas_src>

<mosaic_0001>
module attributes {stable_mosaic.version = 11 : i64} {
  func.func @_causal_conv1d_kernel(%arg0: i32, %arg1: i32, %arg2: memref<2x4x128xf32, #tpu.memory_space<vmem>>, %arg3: memref<2x4x128xf32, #tpu.memory_space<vmem>>, %arg4: memref<8x12xf32, #tpu.memory_space<vmem>>, %arg5: memref<8x1xf32, #tpu.memory_space<vmem>>, %arg6: memref<2x8x128xf32, #tpu.memory_space<vmem>>) attributes {dimension_semantics = [#tpu.dimension_semantics<parallel>, #tpu.dimension_semantics<parallel>], iteration_bounds = array<i64: 1, 1>, scalar_prefetch = 0 : i64, scratch_operands = 0 : i64, tpu.core_type = #tpu.core_type<tc>, window_params = [{transform_indices = @transform_0, window_bounds = array<i64: 2, 4, 128>}, {transform_indices = @transform_1, window_bounds = array<i64: 2, 4, 128>}, {pipeline_mode = #tpu.pipeline_mode<synchronous>, transform_indices = @transform_2, window_bounds = array<i64: 8, 12>}, {pipeline_mode = #tpu.pipeline_mode<synchronous>, transform_indices = @transform_3, window_bounds = array<i64: 8, 1>}, {transform_indices = @transform_4, window_bounds = array<i64: 2, 8, 128>}]} {
    %c0 = arith.constant 0 : index
    %c0_0 = arith.constant 0 : index
    %c0_1 = arith.constant 0 : index
    %0 = vector.load %arg2[%c0, %c0_0, %c0_1] : memref<2x4x128xf32, #tpu.memory_space<vmem>>, vector<2x4x128xf32>
    %c0_2 = arith.constant 0 : index
    %c0_3 = arith.constant 0 : index
    %c0_4 = arith.constant 0 : index
    %1 = vector.load %arg3[%c0_2, %c0_3, %c0_4] : memref<2x4x128xf32, #tpu.memory_space<vmem>>, vector<2x4x128xf32>
    %c0_i32 = arith.constant 0 : i32
    %2 = arith.cmpi eq, %arg1, %c0_i32 : i32
    %cst = arith.constant 0.000000e+00 : f32
    %3 = vector.broadcast %cst : f32 to vector<2x4x128xf32>
    %4 = arith.select %2, %3, %1 : vector<2x4x128xf32>
    %5 = tpu.concatenate %4, %0 in 2 : vector<2x4x128xf32>, vector<2x4x128xf32> -> vector<2x4x256xf32>
    %c0_5 = arith.constant 0 : index
    %c0_6 = arith.constant 0 : index
    %6 = vector.load %arg4[%c0_5, %c0_6] : memref<8x12xf32, #tpu.memory_space<vmem>>, vector<8x12xf32>
    %c0_7 = arith.constant 0 : index
    %c0_8 = arith.constant 0 : index
    %7 = vector.load %arg5[%c0_7, %c0_8] : memref<8x1xf32, #tpu.memory_space<vmem>>, vector<8x1xf32>
    %c132_i32 = arith.constant 132 : i32
    %8 = tpu.dynamic_rotate %5 by %c132_i32 dim 2 : vector<2x4x256xf32>, i32 -> vector<2x4x256xf32>
    %9 = vector.extract_strided_slice %8 {offsets = [0, 0, 0], sizes = [2, 4, 128], strides = [1, 1, 1]} : vector<2x4x256xf32> to vector<2x4x128xf32>
    %c130_i32 = arith.constant 130 : i32
    %10 = tpu.dynamic_rotate %5 by %c130_i32 dim 2 : vector<2x4x256xf32>, i32 -> vector<2x4x256xf32>
    %11 = vector.extract_strided_slice %10 {offsets = [0, 0, 0], sizes = [2, 4, 128], strides = [1, 1, 1]} : vector<2x4x256xf32> to vector<2x4x128xf32>
    %12 = vector.extract_strided_slice %5 {offsets = [0, 0, 128], sizes = [2, 4, 128], strides = [1, 1, 1]} : vector<2x4x256xf32> to vector<2x4x128xf32>
    %13 = tpu.concatenate %9, %11, %12 in 1 : vector<2x4x128xf32>, vector<2x4x128xf32>, vector<2x4x128xf32> -> vector<2x12x128xf32>
    %14 = vector.extract_strided_slice %13 {offsets = [0, 0, 0], sizes = [1, 12, 128], strides = [1, 1, 1]} : vector<2x12x128xf32> to vector<1x12x128xf32>
    %15 = vector.shape_cast %14 : vector<1x12x128xf32> to vector<12x128xf32>
    %cst_9 = arith.constant dense<0.000000e+00> : vector<8x128xf32>
    %16 = tpu.matmul %6, %15, %cst_9 {dimension_numbers = #tpu.dot_dimension_numbers<[1], [0], [0], [1], [0, 0, 1, 1], [], []>} : vector<8x12xf32>, vector<12x128xf32>, vector<8x128xf32> -> vector<8x128xf32>
    %17 = vector.broadcast %7 : vector<8x1xf32> to vector<8x128xf32>
    %18 = arith.addf %16, %17 : vector<8x128xf32>
    %c0_10 = arith.constant 0 : index
    %c0_11 = arith.constant 0 : index
    %c0_12 = arith.constant 0 : index
    %19 = vector.load %arg6[%c0_10, %c0_11, %c0_12] : memref<2x8x128xf32, #tpu.memory_space<vmem>>, vector<1x8x128xf32>
    %20 = vector.shape_cast %19 : vector<1x8x128xf32> to vector<8x128xf32>
    %21 = vector.shape_cast %18 : vector<8x128xf32> to vector<1x8x128xf32>
    tpu.vector_store %arg6[%c0_10, %c0_11, %c0_12], %21 {strides = array<i32>} : memref<2x8x128xf32, #tpu.memory_space<vmem>>, vector<1x8x128xf32>,
    %22 = vector.extract_strided_slice %13 {offsets = [1, 0, 0], sizes = [1, 12, 128], strides = [1, 1, 1]} : vector<2x12x128xf32> to vector<1x12x128xf32>
    %23 = vector.shape_cast %22 : vector<1x12x128xf32> to vector<12x128xf32>
    %cst_13 = arith.constant dense<0.000000e+00> : vector<8x128xf32>
    %24 = tpu.matmul %6, %23, %cst_13 {dimension_numbers = #tpu.dot_dimension_numbers<[1], [0], [0], [1], [0, 0, 1, 1], [], []>} : vector<8x12xf32>, vector<12x128xf32>, vector<8x128xf32> -> vector<8x128xf32>
    %25 = vector.broadcast %7 : vector<8x1xf32> to vector<8x128xf32>
    %26 = arith.addf %24, %25 : vector<8x128xf32>
    %c1 = arith.constant 1 : index
    %c0_14 = arith.constant 0 : index
    %c0_15 = arith.constant 0 : index
    %27 = vector.load %arg6[%c1, %c0_14, %c0_15] : memref<2x8x128xf32, #tpu.memory_space<vmem>>, vector<1x8x128xf32>
    %28 = vector.shape_cast %27 : vector<1x8x128xf32> to vector<8x128xf32>
    %29 = vector.shape_cast %26 : vector<8x128xf32> to vector<1x8x128xf32>
    tpu.vector_store %arg6[%c1, %c0_14, %c0_15], %29 {strides = array<i32>} : memref<2x8x128xf32, #tpu.memory_space<vmem>>, vector<1x8x128xf32>,
    return
  }
  func.func @transform_0(%arg0: i32, %arg1: i32) -> (i32, i32, i32) {
    %c0_i32 = arith.constant 0 : i32
    %c0_i32_0 = arith.constant 0 : i32
    return %arg0, %c0_i32, %arg1 : i32, i32, i32
  }
  func.func @transform_1(%arg0: i32, %arg1: i32) -> (i32, i32, i32) {
    %c1_i32 = arith.constant 1 : i32
    %0 = arith.muli %arg1, %c1_i32 : i32
    %c1_i32_0 = arith.constant 1 : i32
    %1 = arith.subi %0, %c1_i32_0 : i32
    %c0_i32 = arith.constant 0 : i32
    %2 = arith.maxsi %1, %c0_i32 : i32
    %c0_i32_1 = arith.constant 0 : i32
    %c0_i32_2 = arith.constant 0 : i32
    return %arg0, %c0_i32_1, %2 : i32, i32, i32
  }
  func.func @transform_2(%arg0: i32, %arg1: i32) -> (i32, i32) {
    %c0_i32 = arith.constant 0 : i32
    %c0_i32_0 = arith.constant 0 : i32
    %c0_i32_1 = arith.constant 0 : i32
    return %c0_i32, %c0_i32_0 : i32, i32
  }
  func.func @transform_3(%arg0: i32, %arg1: i32) -> (i32, i32) {
    %c0_i32 = arith.constant 0 : i32
    %c0_i32_0 = arith.constant 0 : i32
    %c0_i32_1 = arith.constant 0 : i32
    return %c0_i32, %c0_i32_0 : i32, i32
  }
  func.func @transform_4(%arg0: i32, %arg1: i32) -> (i32, i32, i32) {
    %c0_i32 = arith.constant 0 : i32
    %c0_i32_0 = arith.constant 0 : i32
    return %arg0, %c0_i32, %arg1 : i32, i32, i32
  }
}

</mosaic_0001>

<llo_original>
// kernel: tpu_custom_call.1
$region0: #{tpu_custom_call.1}
  #allocation0 [shape = 'u32[]', space=smem, size = 0x4, offset = 0x4, fixed_abs, tag = 'smem constant byte address 0x4 - core index']
  #allocation1 [shape = 'u32[144,128]{1,0:T(1,128)}', space=vmem, size = 0x12000, scoped, tag = 'internal scratch']
  %s0 = inlined_call_operand.vmem [shape: f32[2,4,16], index: 0, kind: input, shape index: {}]
  %s1 = inlined_call_operand.hbm [shape: f32[2,4,16], index: 1, kind: input, shape index: {}]
  %s2 = inlined_call_operand.vmem [shape: f32[8,12], index: 2, kind: input, shape index: {}]
  %s3 = inlined_call_operand.vmem [shape: f32[8,1], index: 3, kind: input, shape index: {}]
  %s4 = inlined_call_operand.hbm [shape: f32[2,8,16], index: 4, kind: output, shape index: {}]
  %s5 = sld [smem:[#allocation0]]
  $region30: #{tpu_custom_call.1} parent=0
    _
  %s7 = ssub.s32 1, %s5
  %s8 = scalar_select 0, %s7, %s5
  $region1: #{tpu_custom_call.1} parent=0
    #allocation2 [shape = 'u8[4096]{0}', space=vmem, size = 0x1000, scoped, tag = 'input window, operand 1, single buffered']
    #allocation3 [shape = 's32[1]{0}', space=sflag, size = 0x4, scoped, tag = 'scoped memory for tpu_custom_call.1']
    #allocation4 [shape = 's32[1]{0}', space=sflag, size = 0x4, scoped, tag = 'scoped memory for tpu_custom_call.1']
    #allocation5 [shape = 'u8[8192]{0}', space=vmem, size = 0x2000, scoped, tag = 'output window, operand 0, single buffered']
    %9 = vsyncpa [#allocation3], 0
    %10 = vsyncpa [#allocation4], 0
    // Predicated region
    $region2: #{tpu_custom_call.1} parent=1 // pred_check
      _
    $region3: #{tpu_custom_call.1} parent=1 // pred_check_branch
      %12 = sbr.rel (0) target = $region5
    $region4: #{tpu_custom_call.1} parent=1 // pred_region
      _
    $region5: #{tpu_custom_call.1} parent=1 // pred_fallthru
      _
    // Predicated region
    $region6: #{tpu_custom_call.1} parent=1 // pred_check
      _
    $region7: #{tpu_custom_call.1} parent=1 // pred_check_branch
      %14 = sbr.rel (0) target = $region9
    $region8: #{tpu_custom_call.1} parent=1 // pred_region
      %s15 = ssub.s32 0, 1
      %p16 = scmp.gt.s32.totalorder %s15, 0
      %s17 = scalar_select %p16, %s15, 0
      %s19 = ssub.s32 128, 128
      %20 = vsyncadd [#allocation3], %s19
      %s21 = smul.addr %s17, 64
      %s22 = scalar_lea.hbm %s1, %s21
      %s23 = sshll.u32 [#allocation2], 4
      %s24 = int_to_ptr.vmem [resolvable:$true] %s23
      %29 = dma.hbm_to_vmem [thread:$0]  %s22, 128, %s24, [#allocation3], 64, 64, 4
    $region9: #{tpu_custom_call.1} parent=1 // pred_fallthru
      _
    // Predicated region
    $region10: #{tpu_custom_call.1} parent=1 // pred_check
      _
    $region11: #{tpu_custom_call.1} parent=1 // pred_check_branch
      %31 = sbr.rel (0) target = $region13
    $region12: #{tpu_custom_call.1} parent=1 // pred_region
      _
    $region13: #{tpu_custom_call.1} parent=1 // pred_fallthru
      _
    // Predicated region
    $region14: #{tpu_custom_call.1} parent=1 // pred_check
      _
    $region15: #{tpu_custom_call.1} parent=1 // pred_check_branch
      %33 = sbr.rel (0) target = $region17
    $region16: #{tpu_custom_call.1} parent=1 // pred_region
      _
    $region17: #{tpu_custom_call.1} parent=1 // pred_fallthru
      _
    // Predicated region
    $region18: #{tpu_custom_call.1} parent=1 // pred_check
      _
    $region19: #{tpu_custom_call.1} parent=1 // pred_check_branch
      %35 = sbr.rel (0) target = $region21
    $region20: #{tpu_custom_call.1} parent=1 // pred_region
      %36 = dma.done [#allocation3], 128
    $region21: #{tpu_custom_call.1} parent=1 // pred_fallthru
      _
    %s37 = ssub.s32 0, 1
    %p38 = scmp.gt.s32.totalorder %s37, 0
    %s39 = scalar_select %p38, %s37, 0
    %v40 = vld [vmem:[%s0] sm:$0xf]
    %v41 = vld [vmem:[%s0 + $0x4] sm:$0xf]
    %v42 = vld [vmem:[#allocation2] sm:$0xf]
    %v43 = vld [vmem:[#allocation2 + $0x4] sm:$0xf]
    %p44 = scmp.eq.s32.totalorder 0, 0
    %s45 = scalar_select %p44, 1, 0
    %v46 = vstv %s45
    %vm47 = vcmp.eq.s32.totalorder %v46, 1
    %v48 = vsel %vm47, 0.0, %v42
    %v49 = vsel %vm47, 0.0, %v43
    %v50 = vld [vmem:[%s2] sm:$0xff]
    %v51 = vld [vmem:[%s3] sm:$0xff]
    %52 = vrot.lane.b32.xlu0 %v48, 4
    %v53 = vpop.permute.xlu0 %52
    %54 = vrot.lane.b32.xlu0 %v49, 4
    %v55 = vpop.permute.xlu0 %54
    %56 = vrot.lane.b32.xlu0 %v40, 4
    %v57 = vpop.permute.xlu0 %56
    %58 = vrot.lane.b32.xlu0 %v41, 4
    %v59 = vpop.permute.xlu0 %58
    %v60 = vlaneseq
    %v61 = vand.u32 %v60, 127
    %vm62 = vcmp.lt.s32.totalorder %v61, 4
    %v63 = vsel %vm62, %v53, %v57
    %v64 = vsel %vm62, %v55, %v59
    %65 = vrot.lane.b32.xlu0 %v48, 2
    %v66 = vpop.permute.xlu0 %65
    %67 = vrot.lane.b32.xlu0 %v49, 2
    %v68 = vpop.permute.xlu0 %67
    %69 = vrot.lane.b32.xlu0 %v40, 2
    %v70 = vpop.permute.xlu0 %69
    %71 = vrot.lane.b32.xlu0 %v41, 2
    %v72 = vpop.permute.xlu0 %71
    %vm73 = vcmp.lt.s32.totalorder %v61, 2
    %v74 = vsel %vm73, %v66, %v70
    %v75 = vsel %vm73, %v68, %v72
    %v78 = vrot.slane %v74, 4
    %v79 = vrot.slane %v75, 4
    %vm82 = vcmask 1043456
    %v83 = vsel %vm82, %v63, %v78
    %v84 = vsel %vm82, %v64, %v79
    %86 = vset.pattern.permute.xlu0 0
    %87 = vperm.xlu0 %86, %v51
    %v88 = vpop.permute.xlu0 %87
    %vm90 = vcmask 97280
    %v92 = vsel %vm90, %v50, 0
    %v95 = vsel %vm82, %v40, 0
    %97 = vmatprep.subr.mxu0 0.0
    %98 = vmatpush1.msra.mxu0 %v83
    %99 = vmatprep.subr.mxu0 0.0
    %100 = vmatpush1.msra.mxu0 %v95
    %101 = vmatprep.subr.mxu0 0.0
    %102 = vmatpush1.msra.mxu0 0.0
    %103 = vmatprep.subr.mxu0 0.0
    %104 = vmatpush1.msra.mxu0 0.0
    %105 = vmatprep.subr.mxu0 0.0
    %106 = vmatpush1.msra.mxu0 0.0
    %107 = vmatprep.subr.mxu0 0.0
    %108 = vmatpush1.msra.mxu0 0.0
    %109 = vmatprep.subr.mxu0 0.0
    %110 = vmatpush1.msra.mxu0 0.0
    %111 = vmatprep.subr.mxu0 0.0
    %112 = vmatpush1.msra.mxu0 0.0
    %113 = vmatprep.subr.mxu0 0.0
    %114 = vmatpush1.msra.mxu0 0.0
    %115 = vmatprep.subr.mxu0 0.0
    %116 = vmatpush1.msra.mxu0 0.0
    %117 = vmatprep.subr.mxu0 0.0
    %118 = vmatpush1.msra.mxu0 0.0
    %119 = vmatprep.subr.mxu0 0.0
    %120 = vmatpush1.msra.mxu0 0.0
    %121 = vmatprep.subr.mxu0 0.0
    %122 = vmatpush1.msra.mxu0 0.0
    %123 = vmatprep.subr.mxu0 0.0
    %124 = vmatpush1.msra.mxu0 0.0
    %125 = vmatprep.subr.mxu0 0.0
    %126 = vmatpush1.msra.mxu0 0.0
    %127 = vmatprep.subr.mxu0 0.0
    %128 = vmatpush1.msra.mxu0 0.0
    %129 = vmatprep.subr.mxu0 0.0
    %130 = vmatpush1.msra.mxu0 0.0
    %131 = vmatprep.subr.mxu0 0.0
    %132 = vmatpush1.msra.mxu0 0.0
    %133 = vmatprep.subr.mxu0 0.0
    %134 = vmatpush1.msra.mxu0 0.0
    %135 = vmatprep.subr.mxu0 0.0
    %136 = vmatpush1.msra.mxu0 0.0
    %137 = vmatprep.subr.mxu0 0.0
    %138 = vmatpush1.msra.mxu0 0.0
    %139 = vmatprep.subr.mxu0 0.0
    %140 = vmatpush1.msra.mxu0 0.0
    %141 = vmatprep.subr.mxu0 0.0
    %142 = vmatpush1.msra.mxu0 0.0
    %143 = vmatprep.subr.mxu0 0.0
    %144 = vmatpush1.msra.mxu0 0.0
    %145 = vmatprep.subr.mxu0 0.0
    %146 = vmatpush1.msra.mxu0 0.0
    %147 = vmatprep.subr.mxu0 0.0
    %148 = vmatpush1.msra.mxu0 0.0
    %149 = vmatprep.subr.mxu0 0.0
    %150 = vmatpush1.msra.mxu0 0.0
    %151 = vmatprep.subr.mxu0 0.0
    %152 = vmatpush1.msra.mxu0 0.0
    %153 = vmatprep.subr.mxu0 0.0
    %154 = vmatpush1.msra.mxu0 0.0
    %155 = vmatprep.subr.mxu0 0.0
    %156 = vmatpush1.msra.mxu0 0.0
    %157 = vmatprep.subr.mxu0 0.0
    %158 = vmatpush1.msra.mxu0 0.0
    %159 = vmatprep.subr.mxu0 0.0
    %160 = vmatpush1.msra.mxu0 0.0
    %161 = vmatprep.mubr.f32.mxu0 0.0
    %162 = vmatmul.mubr.f32.gmra.mrb[0].mxu0 %v92
    %v163 = vpop.f32.mrb[0].mxu0
    %v164 = vadd.f32 %v88, %v163
    %v165 = vpop.f32.mrb[0].mxu0
    %166 = vdwg.mxu0
    %167 = vst [vmem:[#allocation5] sm:$0xff] %v164
    %v169 = vsel %vm82, %v41, 0
    %171 = vmatprep.subr.mxu0 0.0
    %172 = vmatpush1.msra.mxu0 %v84
    %173 = vmatprep.subr.mxu0 0.0
    %174 = vmatpush1.msra.mxu0 %v169
    %175 = vmatprep.subr.mxu0 0.0
    %176 = vmatpush1.msra.mxu0 0.0
    %177 = vmatprep.subr.mxu0 0.0
    %178 = vmatpush1.msra.mxu0 0.0
    %179 = vmatprep.subr.mxu0 0.0
    %180 = vmatpush1.msra.mxu0 0.0
    %181 = vmatprep.subr.mxu0 0.0
    %182 = vmatpush1.msra.mxu0 0.0
    %183 = vmatprep.subr.mxu0 0.0
    %184 = vmatpush1.msra.mxu0 0.0
    %185 = vmatprep.subr.mxu0 0.0
    %186 = vmatpush1.msra.mxu0 0.0
    %187 = vmatprep.subr.mxu0 0.0
    %188 = vmatpush1.msra.mxu0 0.0
    %189 = vmatprep.subr.mxu0 0.0
    %190 = vmatpush1.msra.mxu0 0.0
    %191 = vmatprep.subr.mxu0 0.0
    %192 = vmatpush1.msra.mxu0 0.0
    %193 = vmatprep.subr.mxu0 0.0
    %194 = vmatpush1.msra.mxu0 0.0
    %195 = vmatprep.subr.mxu0 0.0
    %196 = vmatpush1.msra.mxu0 0.0
    %197 = vmatprep.subr.mxu0 0.0
    %198 = vmatpush1.msra.mxu0 0.0
    %199 = vmatprep.subr.mxu0 0.0
    %200 = vmatpush1.msra.mxu0 0.0
    %201 = vmatprep.subr.mxu0 0.0
    %202 = vmatpush1.msra.mxu0 0.0
    %203 = vmatprep.subr.mxu0 0.0
    %204 = vmatpush1.msra.mxu0 0.0
    %205 = vmatprep.subr.mxu0 0.0
    %206 = vmatpush1.msra.mxu0 0.0
    %207 = vmatprep.subr.mxu0 0.0
    %208 = vmatpush1.msra.mxu0 0.0
    %209 = vmatprep.subr.mxu0 0.0
    %210 = vmatpush1.msra.mxu0 0.0
    %211 = vmatprep.subr.mxu0 0.0
    %212 = vmatpush1.msra.mxu0 0.0
    %213 = vmatprep.subr.mxu0 0.0
    %214 = vmatpush1.msra.mxu0 0.0
    %215 = vmatprep.subr.mxu0 0.0
    %216 = vmatpush1.msra.mxu0 0.0
    %217 = vmatprep.subr.mxu0 0.0
    %218 = vmatpush1.msra.mxu0 0.0
    %219 = vmatprep.subr.mxu0 0.0
    %220 = vmatpush1.msra.mxu0 0.0
    %221 = vmatprep.subr.mxu0 0.0
    %222 = vmatpush1.msra.mxu0 0.0
    %223 = vmatprep.subr.mxu0 0.0
    %224 = vmatpush1.msra.mxu0 0.0
    %225 = vmatprep.subr.mxu0 0.0
    %226 = vmatpush1.msra.mxu0 0.0
    %227 = vmatprep.subr.mxu0 0.0
    %228 = vmatpush1.msra.mxu0 0.0
    %229 = vmatprep.subr.mxu0 0.0
    %230 = vmatpush1.msra.mxu0 0.0
    %231 = vmatprep.subr.mxu0 0.0
    %232 = vmatpush1.msra.mxu0 0.0
    %233 = vmatprep.subr.mxu0 0.0
    %234 = vmatpush1.msra.mxu0 0.0
    %235 = vmatprep.mubr.f32.mxu0 0.0
    %236 = vmatmul.mubr.f32.gmra.mrb[0].mxu0 %v92
    %v237 = vpop.f32.mrb[0].mxu0
    %v238 = vadd.f32 %v88, %v237
    %v239 = vpop.f32.mrb[0].mxu0
    %240 = vdwg.mxu0
    %s241 = scalar_lea.vmem [#allocation5], 8
    %242 = vst [vmem:[%s241] sm:$0xff] %v238
    // Predicated region
    $region22: #{tpu_custom_call.1} parent=1 // pred_check
      _
    $region23: #{tpu_custom_call.1} parent=1 // pred_check_branch
      %244 = sbr.rel (0) target = $region25
    $region24: #{tpu_custom_call.1} parent=1 // pred_region
      %s246 = ssub.s32 256, 256
      %247 = vsyncadd [#allocation4], %s246
      %s248 = sshll.u32 [#allocation5], 4
      %s249 = int_to_ptr.vmem [resolvable:$true] %s248
      %254 = dma.vmem_to_hbm [thread:$0]  %s249, 256, %s4, [#allocation4], 128, 128, 8
    $region25: #{tpu_custom_call.1} parent=1 // pred_fallthru
      _
    // Predicated region
    $region26: #{tpu_custom_call.1} parent=1 // pred_check
      _
    $region27: #{tpu_custom_call.1} parent=1 // pred_check_branch
      %256 = sbr.rel (0) target = $region29
    $region28: #{tpu_custom_call.1} parent=1 // pred_region
      %257 = dma.done [#allocation4], 256
    $region29: #{tpu_custom_call.1} parent=1 // pred_fallthru
      _
    %258 = vsyncpa [#allocation3], 1
    %259 = vsyncpa [#allocation4], 1

</llo_original>
